<compile_context>
chip_gen: v7x
topology: tpu7x:2x2x1
jax: 0.10.0
libtpu: 0.0.40
codegen_flags: <defaults>
</compile_context>

<pallas_src>
import math
import functools

import numpy as np
import jax
import jax.numpy as jnp
from jax.experimental import pallas as pl
from jax.experimental.pallas import tpu as pltpu


# ---------------------------------------------------------------------------
# Tiling heuristics
# ---------------------------------------------------------------------------

def _pick_hidden_tile(hidden_size, k_dim, itemsize, budget_bytes=20 << 20):
    """Hidden-chunk width th.  Weight tile is (k_dim, 9*th); keep 2x (double
    buffer) under ~20 MiB so it fits v7x's 64 MiB VMEM with headroom."""
    if hidden_size % 128 != 0:
        # Small / odd H: single tile.  9*H is the full axis so the (8,128)
        # block-divisibility rule is satisfied and there is zero padding.
        return hidden_size
    for th in (512, 256, 128):
        if hidden_size % th == 0 and 2 * 9 * k_dim * th * itemsize <= budget_bytes:
            return th
    return 128


def _pick_batch_tile(batch):
    """Batch tile (rows of the MXU push).  Capped so the elementwise epilogue's
    ~19 live (tb, th) f32 temporaries don't spill too hard at large B."""
    for tb in (256, 128, 64, 32, 16, 8):
        if batch % tb == 0:
            return tb
    return batch


# ---------------------------------------------------------------------------
# Kernel
# ---------------------------------------------------------------------------

def _assoc_lstm_kernel(xh_ref, c_ref, w_ref, h_out_ref, c_out_ref, *, th):
    """One associative-LSTM step for one (hidden-tile, batch-tile) block.

    xh_ref : (tb, K+1)       -- [x | h | 1] (ones column folds the bias)
    c_ref  : (2, tb, th)     -- cell state, real/imag planes
    w_ref  : (1, K+1, 9*th)  -- fused weight slab for this hidden tile
    h_out  : (2, tb, th)
    c_out  : (2, tb, th)     -- aliased onto the incoming c planes
    """
    # Single wide MXU push (bias included via the ones column), f32 accumulate.
    z = jnp.dot(xh_ref[...], w_ref[0], preferred_element_type=jnp.float32)

    def grp(g):
        # Static slice; lane-aligned when th % 128 == 0, cheap in-register
        # relayout otherwise (small-H regime).
        return z[:, g * th:(g + 1) * th]

    def bound(ur, ui):
        # torch: u / clamp(sqrt(ur^2 + ui^2), min=1)
        #      == u * (|u|^2 > 1 ? rsqrt(|u|^2) : 1)   (EUP rsqrt, VPU muls)
        mag2 = ur * ur + ui * ui
        inv = jnp.where(mag2 > 1.0, jax.lax.rsqrt(mag2), 1.0)
        return ur * inv, ui * inv

    g_f = jax.nn.sigmoid(grp(0))
    g_i = jax.nn.sigmoid(grp(1))
    g_o = jax.nn.sigmoid(grp(2))
    ri_r, ri_i = bound(grp(3), grp(4))
    ro_r, ro_i = bound(grp(5), grp(6))
    u_r, u_i = bound(grp(7), grp(8))

    c_r = c_ref[0].astype(jnp.float32)
    c_i = c_ref[1].astype(jnp.float32)

    # c_t = g_f * c + r_i (*) (g_i * u)        ((*) = complex multiply)
    gi_ur = g_i * u_r
    gi_ui = g_i * u_i
    ct_r = g_f * c_r + (ri_r * gi_ur - ri_i * gi_ui)
    ct_i = g_f * c_i + (ri_r * gi_ui + ri_i * gi_ur)

    # h_t = g_o * bound(r_o (*) c_t)
    w_r = ro_r * ct_r - ro_i * ct_i
    w_i = ro_r * ct_i + ro_i * ct_r
    hb_r, hb_i = bound(w_r, w_i)

    h_out_ref[0] = (g_o * hb_r).astype(h_out_ref.dtype)
    h_out_ref[1] = (g_o * hb_i).astype(h_out_ref.dtype)
    c_out_ref[0] = ct_r.astype(c_out_ref.dtype)
    c_out_ref[1] = ct_i.astype(c_out_ref.dtype)


# ---------------------------------------------------------------------------
# Parameter fusion (call ONCE at init time — not on the per-step path)
# ---------------------------------------------------------------------------

def fuse_params(params, input_size, hidden_size, weight_dtype=jnp.bfloat16):
    """Fuse i2h/h2h/i2u/h2u (+ biases) into one pre-tiled MXU weight.

    Returns shape (n_hidden_tiles, input_size + 2H + 1, 9*th).  Within a tile,
    columns are ordered [g_f|g_i|g_o|r_i.re|r_i.im|r_o.re|r_o.im|u.re|u.im],
    each th wide; the last input row is the fused bias (matched by the ones
    column appended to [x|h]).  No hidden padding is introduced.
    """
    H = hidden_size
    w_x = jnp.concatenate([params["i2h_w"], params["i2u_w"]], axis=0)      # (9H, in)
    w_h = jnp.concatenate([params["h2h_w"], params["h2u_w"]], axis=0)      # (9H, 2H)
    b = jnp.concatenate([params["i2h_b"] + params["h2h_b"],
                         params["i2u_b"] + params["h2u_b"]], axis=0)       # (9H,)
    w_all = jnp.concatenate([w_x, w_h, b[:, None]], axis=1)                # (9H, K+1)
    k_dim = w_all.shape[1]

    th = _pick_hidden_tile(H, k_dim, jnp.dtype(weight_dtype).itemsize)
    n_h = H // th
    # (9H, K) -> (K, 9, n_h, th) -> (n_h, K, 9, th) -> (n_h, K, 9*th)
    w_all = w_all.T.reshape(k_dim, 9, n_h, th)
    w_fused = w_all.transpose(2, 0, 1, 3).reshape(n_h, k_dim, 9 * th)
    return w_fused.astype(weight_dtype)


# ---------------------------------------------------------------------------
# Forward step
# ---------------------------------------------------------------------------

def lstm_cell_forward(x, h, c, w_fused, hidden_size):
    """One associative-LSTM cell step.  Returns (h_t, (h_t, c_t)) like the module.

    w_fused must come from fuse_params() (built once at init).
    """
    B = x.shape[0]
    H = hidden_size
    n_h, k_dim, nine_th = w_fused.shape
    th = nine_th // 9
    tb = _pick_batch_tile(B)
    n_b = B // tb

    # [x | h | 1]: the ones column makes the bias a normal weight row.
    ones = jnp.ones((B, 1), dtype=x.dtype)
    xh = jnp.concatenate([x, h, ones], axis=1).astype(w_fused.dtype)       # (B, K+1)
    # Cell state as lane-dense real/imag planes (leading-axis split).
    c2 = jnp.stack([c[:, :H], c[:, H:]], axis=0)                           # (2, B, H)

    h2, c2_out = pl.pallas_call(
        functools.partial(_assoc_lstm_kernel, th=th),
        out_shape=(jax.ShapeDtypeStruct((2, B, H), h.dtype),
                   jax.ShapeDtypeStruct((2, B, H), c.dtype)),
        grid=(n_h, n_b),   # hidden tiles outer (weight slab stays resident over b)
        in_specs=[
            pl.BlockSpec((tb, k_dim), lambda j, b: (b, 0)),                # xh
            pl.BlockSpec((2, tb, th), lambda j, b: (0, b, j)),             # c planes
            pl.BlockSpec((1, k_dim, nine_th), lambda j, b: (j, 0, 0)),     # weight slab
        ],
        out_specs=(
            pl.BlockSpec((2, tb, th), lambda j, b: (0, b, j)),             # h planes
            pl.BlockSpec((2, tb, th), lambda j, b: (0, b, j)),             # c_t planes
        ),
        input_output_aliases={1: 1},   # c planes updated in place (dtypes match)
        compiler_params=pltpu.CompilerParams(
            dimension_semantics=("parallel", "parallel"),
            vmem_limit_bytes=32 * 1024 * 1024,
        ),
    )(xh, c2, w_fused)

    # Back to the module's (B, 2H) [real | imag] layout.
    h_t = jnp.concatenate([h2[0], h2[1]], axis=1)
    c_t = jnp.concatenate([c2_out[0], c2_out[1]], axis=1)
    return h_t, (h_t, c_t)


# ---------------------------------------------------------------------------
# Init + pure-JAX reference (mirrors the PyTorch module)
# ---------------------------------------------------------------------------

def init_params(key, input_size, hidden_size):
    """Deterministic init mirroring reset_parameters(): U(-std, std), std = 1/sqrt(H)."""
    std = 1.0 / math.sqrt(hidden_size)
    shapes = {
        "i2h_w": (7 * hidden_size, input_size),
        "i2h_b": (7 * hidden_size,),
        "h2h_w": (7 * hidden_size, 2 * hidden_size),
        "h2h_b": (7 * hidden_size,),
        "i2u_w": (2 * hidden_size, input_size),
        "i2u_b": (2 * hidden_size,),
        "h2u_w": (2 * hidden_size, 2 * hidden_size),
        "h2u_b": (2 * hidden_size,),
    }
    params = {}
    for name, shape in shapes.items():
        key, sub = jax.random.split(key)
        params[name] = jax.random.uniform(sub, shape, jnp.float32, -std, std)
    return params


def reference_forward(x, h, c, params, H):
    """Pure-JAX reference of the PyTorch forward (for correctness check)."""
    def bound(u):
        ur, ui = u[:, :H], u[:, H:]
        d = jnp.maximum(jnp.sqrt(ur * ur + ui * ui), 1.0)
        return u / jnp.concatenate([d, d], axis=1)

    def cmul(u, v):
        ur, ui = u[:, :H], u[:, H:]
        vr, vi = v[:, :H], v[:, H:]
        return jnp.concatenate([ur * vr - ui * vi, ur * vi + ui * vr], axis=1)

    preact = (x @ params["i2h_w"].T + params["i2h_b"]
              + h @ params["h2h_w"].T + params["h2h_b"])
    u_pre = (x @ params["i2u_w"].T + params["i2u_b"]
             + h @ params["h2u_w"].T + params["h2u_b"])
    gates = jax.nn.sigmoid(preact[:, :3 * H])
    g_f, g_i, g_o = gates[:, :H], gates[:, H:2 * H], gates[:, 2 * H:3 * H]
    g_f, g_i, g_o = (jnp.tile(g, (1, 2)) for g in (g_f, g_i, g_o))
    r_i = bound(preact[:, 3 * H:5 * H])
    r_o = bound(preact[:, 5 * H:7 * H])
    u = bound(u_pre)
    c_t = g_f * c + cmul(r_i, g_i * u)
    h_t = g_o * bound(cmul(r_o, c_t))
    return h_t, c_t


if __name__ == "__main__":
    B, INPUT_SIZE, HIDDEN_SIZE = 8, 16, 32

    key = jax.random.PRNGKey(0)
    k_param, k_x, k_h, k_c = jax.random.split(key, 4)

    params = init_params(k_param, INPUT_SIZE, HIDDEN_SIZE)
    x = jax.random.normal(k_x, (B, INPUT_SIZE), jnp.float32)
    h0 = jax.random.normal(k_h, (B, 2 * HIDDEN_SIZE), jnp.float32)
    c0 = jax.random.normal(k_c, (B, 2 * HIDDEN_SIZE), jnp.float32)

    h_expect, c_expect = reference_forward(x, h0, c0, params, HIDDEN_SIZE)

    step = jax.jit(functools.partial(lstm_cell_forward, hidden_size=HIDDEN_SIZE))

    # --- f32 fused weights: matches the PyTorch/JAX reference tightly. -------
    w_f32 = fuse_params(params, INPUT_SIZE, HIDDEN_SIZE, weight_dtype=jnp.float32)
    h_t, (h_state, c_t) = step(x, h0, c0, w_f32)
    jax.block_until_ready((h_t, c_t))
    np.testing.assert_allclose(np.asarray(h_t), np.asarray(h_expect), rtol=1e-4, atol=1e-5)
    np.testing.assert_allclose(np.asarray(c_t), np.asarray(c_expect), rtol=1e-4, atol=1e-5)

    # --- bf16 fused weights (perf default): half the weight HBM traffic. -----
    w_bf16 = fuse_params(params, INPUT_SIZE, HIDDEN_SIZE)   # default bf16
    h_b, (_, c_b) = step(x, h0, c0, w_bf16)
    jax.block_until_ready((h_b, c_b))
    np.testing.assert_allclose(np.asarray(h_b), np.asarray(h_expect), rtol=1e-1, atol=1e-1)
    np.testing.assert_allclose(np.asarray(c_b), np.asarray(c_expect), rtol=1e-1, atol=1e-1)

    print("KERNEL_OK")
</pallas_src>

<mosaic_0001>
module attributes {stable_mosaic.version = 11 : i64} {
  func.func @_assoc_lstm_kernel(%arg0: i32, %arg1: i32, %arg2: memref<8x81xf32, #tpu.memory_space<vmem>>, %arg3: memref<2x8x32xf32, #tpu.memory_space<vmem>>, %arg4: memref<1x81x288xf32, #tpu.memory_space<vmem>>, %arg5: memref<2x8x32xf32, #tpu.memory_space<vmem>>, %arg6: memref<2x8x32xf32, #tpu.memory_space<vmem>>) attributes {dimension_semantics = [#tpu.dimension_semantics<parallel>, #tpu.dimension_semantics<parallel>], iteration_bounds = array<i64: 1, 1>, scalar_prefetch = 0 : i64, scratch_operands = 0 : i64, tpu.core_type = #tpu.core_type<tc>, window_params = [{transform_indices = @transform_0, window_bounds = array<i64: 8, 81>}, {transform_indices = @transform_1, window_bounds = array<i64: 2, 8, 32>}, {transform_indices = @transform_2, window_bounds = array<i64: 1, 81, 288>}, {transform_indices = @transform_3, window_bounds = array<i64: 2, 8, 32>}, {transform_indices = @transform_4, window_bounds = array<i64: 2, 8, 32>}]} {
    %c0 = arith.constant 0 : index
    %c0_0 = arith.constant 0 : index
    %0 = vector.load %arg2[%c0, %c0_0] : memref<8x81xf32, #tpu.memory_space<vmem>>, vector<8x81xf32>
    %c0_1 = arith.constant 0 : index
    %c0_2 = arith.constant 0 : index
    %c0_3 = arith.constant 0 : index
    %1 = vector.load %arg4[%c0_1, %c0_2, %c0_3] : memref<1x81x288xf32, #tpu.memory_space<vmem>>, vector<1x81x288xf32>
    %2 = vector.shape_cast %1 : vector<1x81x288xf32> to vector<81x288xf32>
    %cst = arith.constant dense<0.000000e+00> : vector<8x288xf32>
    %3 = tpu.matmul %0, %2, %cst {dimension_numbers = #tpu.dot_dimension_numbers<[1], [0], [0], [1], [0, 0, 1, 1], [], []>} : vector<8x81xf32>, vector<81x288xf32>, vector<8x288xf32> -> vector<8x288xf32>
    %4 = vector.extract_strided_slice %3 {offsets = [0, 0], sizes = [8, 32], strides = [1, 1]} : vector<8x288xf32> to vector<8x32xf32>
    %5 = arith.negf %4 : vector<8x32xf32>
    %6 = math.exp %5 : vector<8x32xf32>
    %cst_4 = arith.constant 1.000000e+00 : f32
    %7 = vector.broadcast %cst_4 : f32 to vector<8x32xf32>
    %8 = arith.addf %7, %6 : vector<8x32xf32>
    %9 = arith.divf %7, %8 : vector<8x32xf32>
    %10 = vector.extract_strided_slice %3 {offsets = [0, 32], sizes = [8, 32], strides = [1, 1]} : vector<8x288xf32> to vector<8x32xf32>
    %11 = arith.negf %10 : vector<8x32xf32>
    %12 = math.exp %11 : vector<8x32xf32>
    %cst_5 = arith.constant 1.000000e+00 : f32
    %13 = vector.broadcast %cst_5 : f32 to vector<8x32xf32>
    %14 = arith.addf %13, %12 : vector<8x32xf32>
    %15 = arith.divf %13, %14 : vector<8x32xf32>
    %16 = vector.extract_strided_slice %3 {offsets = [0, 64], sizes = [8, 32], strides = [1, 1]} : vector<8x288xf32> to vector<8x32xf32>
    %17 = arith.negf %16 : vector<8x32xf32>
    %18 = math.exp %17 : vector<8x32xf32>
    %cst_6 = arith.constant 1.000000e+00 : f32
    %19 = vector.broadcast %cst_6 : f32 to vector<8x32xf32>
    %20 = arith.addf %19, %18 : vector<8x32xf32>
    %21 = arith.divf %19, %20 : vector<8x32xf32>
    %22 = vector.extract_strided_slice %3 {offsets = [0, 96], sizes = [8, 32], strides = [1, 1]} : vector<8x288xf32> to vector<8x32xf32>
    %23 = vector.extract_strided_slice %3 {offsets = [0, 128], sizes = [8, 32], strides = [1, 1]} : vector<8x288xf32> to vector<8x32xf32>
    %24 = arith.mulf %22, %22 : vector<8x32xf32>
    %25 = arith.mulf %23, %23 : vector<8x32xf32>
    %26 = arith.addf %24, %25 : vector<8x32xf32>
    %cst_7 = arith.constant 1.000000e+00 : f32
    %27 = vector.broadcast %cst_7 : f32 to vector<8x32xf32>
    %28 = arith.cmpf ogt, %26, %27 : vector<8x32xf32>
    %29 = math.rsqrt %26 : vector<8x32xf32>
    %cst_8 = arith.constant 1.000000e+00 : f32
    %30 = vector.broadcast %cst_8 : f32 to vector<8x32xf32>
    %31 = arith.select %28, %29, %30 : vector<8x32xi1>, vector<8x32xf32>
    %32 = arith.mulf %22, %31 : vector<8x32xf32>
    %33 = arith.mulf %23, %31 : vector<8x32xf32>
    %34 = vector.extract_strided_slice %3 {offsets = [0, 160], sizes = [8, 32], strides = [1, 1]} : vector<8x288xf32> to vector<8x32xf32>
    %35 = vector.extract_strided_slice %3 {offsets = [0, 192], sizes = [8, 32], strides = [1, 1]} : vector<8x288xf32> to vector<8x32xf32>
    %36 = arith.mulf %34, %34 : vector<8x32xf32>
    %37 = arith.mulf %35, %35 : vector<8x32xf32>
    %38 = arith.addf %36, %37 : vector<8x32xf32>
    %cst_9 = arith.constant 1.000000e+00 : f32
    %39 = vector.broadcast %cst_9 : f32 to vector<8x32xf32>
    %40 = arith.cmpf ogt, %38, %39 : vector<8x32xf32>
    %41 = math.rsqrt %38 : vector<8x32xf32>
    %cst_10 = arith.constant 1.000000e+00 : f32
    %42 = vector.broadcast %cst_10 : f32 to vector<8x32xf32>
    %43 = arith.select %40, %41, %42 : vector<8x32xi1>, vector<8x32xf32>
    %44 = arith.mulf %34, %43 : vector<8x32xf32>
    %45 = arith.mulf %35, %43 : vector<8x32xf32>
    %46 = vector.extract_strided_slice %3 {offsets = [0, 224], sizes = [8, 32], strides = [1, 1]} : vector<8x288xf32> to vector<8x32xf32>
    %47 = vector.extract_strided_slice %3 {offsets = [0, 256], sizes = [8, 32], strides = [1, 1]} : vector<8x288xf32> to vector<8x32xf32>
    %48 = arith.mulf %46, %46 : vector<8x32xf32>
    %49 = arith.mulf %47, %47 : vector<8x32xf32>
    %50 = arith.addf %48, %49 : vector<8x32xf32>
    %cst_11 = arith.constant 1.000000e+00 : f32
    %51 = vector.broadcast %cst_11 : f32 to vector<8x32xf32>
    %52 = arith.cmpf ogt, %50, %51 : vector<8x32xf32>
    %53 = math.rsqrt %50 : vector<8x32xf32>
    %cst_12 = arith.constant 1.000000e+00 : f32
    %54 = vector.broadcast %cst_12 : f32 to vector<8x32xf32>
    %55 = arith.select %52, %53, %54 : vector<8x32xi1>, vector<8x32xf32>
    %56 = arith.mulf %46, %55 : vector<8x32xf32>
    %57 = arith.mulf %47, %55 : vector<8x32xf32>
    %c0_13 = arith.constant 0 : index
    %c0_14 = arith.constant 0 : index
    %c0_15 = arith.constant 0 : index
    %58 = vector.load %arg3[%c0_13, %c0_14, %c0_15] : memref<2x8x32xf32, #tpu.memory_space<vmem>>, vector<1x8x32xf32>
    %59 = vector.shape_cast %58 : vector<1x8x32xf32> to vector<8x32xf32>
    %c1 = arith.constant 1 : index
    %c0_16 = arith.constant 0 : index
    %c0_17 = arith.constant 0 : index
    %60 = vector.load %arg3[%c1, %c0_16, %c0_17] : memref<2x8x32xf32, #tpu.memory_space<vmem>>, vector<1x8x32xf32>
    %61 = vector.shape_cast %60 : vector<1x8x32xf32> to vector<8x32xf32>
    %62 = arith.mulf %15, %56 : vector<8x32xf32>
    %63 = arith.mulf %15, %57 : vector<8x32xf32>
    %64 = arith.mulf %9, %59 : vector<8x32xf32>
    %65 = arith.mulf %32, %62 : vector<8x32xf32>
    %66 = arith.mulf %33, %63 : vector<8x32xf32>
    %67 = arith.subf %65, %66 : vector<8x32xf32>
    %68 = arith.addf %64, %67 : vector<8x32xf32>
    %69 = arith.mulf %9, %61 : vector<8x32xf32>
    %70 = arith.mulf %32, %63 : vector<8x32xf32>
    %71 = arith.mulf %33, %62 : vector<8x32xf32>
    %72 = arith.addf %70, %71 : vector<8x32xf32>
    %73 = arith.addf %69, %72 : vector<8x32xf32>
    %74 = arith.mulf %44, %68 : vector<8x32xf32>
    %75 = arith.mulf %45, %73 : vector<8x32xf32>
    %76 = arith.subf %74, %75 : vector<8x32xf32>
    %77 = arith.mulf %44, %73 : vector<8x32xf32>
    %78 = arith.mulf %45, %68 : vector<8x32xf32>
    %79 = arith.addf %77, %78 : vector<8x32xf32>
    %80 = arith.mulf %76, %76 : vector<8x32xf32>
    %81 = arith.mulf %79, %79 : vector<8x32xf32>
    %82 = arith.addf %80, %81 : vector<8x32xf32>
    %cst_18 = arith.constant 1.000000e+00 : f32
    %83 = vector.broadcast %cst_18 : f32 to vector<8x32xf32>
    %84 = arith.cmpf ogt, %82, %83 : vector<8x32xf32>
    %85 = math.rsqrt %82 : vector<8x32xf32>
    %cst_19 = arith.constant 1.000000e+00 : f32
    %86 = vector.broadcast %cst_19 : f32 to vector<8x32xf32>
    %87 = arith.select %84, %85, %86 : vector<8x32xi1>, vector<8x32xf32>
    %88 = arith.mulf %76, %87 : vector<8x32xf32>
    %89 = arith.mulf %79, %87 : vector<8x32xf32>
    %90 = arith.mulf %21, %88 : vector<8x32xf32>
    %c0_20 = arith.constant 0 : index
    %c0_21 = arith.constant 0 : index
    %c0_22 = arith.constant 0 : index
    %91 = vector.load %arg5[%c0_20, %c0_21, %c0_22] : memref<2x8x32xf32, #tpu.memory_space<vmem>>, vector<1x8x32xf32>
    %92 = vector.shape_cast %91 : vector<1x8x32xf32> to vector<8x32xf32>
    %93 = vector.shape_cast %90 : vector<8x32xf32> to vector<1x8x32xf32>
    tpu.vector_store %arg5[%c0_20, %c0_21, %c0_22], %93 {strides = array<i32>} : memref<2x8x32xf32, #tpu.memory_space<vmem>>, vector<1x8x32xf32>,
    %94 = arith.mulf %21, %89 : vector<8x32xf32>
    %c1_23 = arith.constant 1 : index
    %c0_24 = arith.constant 0 : index
    %c0_25 = arith.constant 0 : index
    %95 = vector.load %arg5[%c1_23, %c0_24, %c0_25] : memref<2x8x32xf32, #tpu.memory_space<vmem>>, vector<1x8x32xf32>
    %96 = vector.shape_cast %95 : vector<1x8x32xf32> to vector<8x32xf32>
    %97 = vector.shape_cast %94 : vector<8x32xf32> to vector<1x8x32xf32>
    tpu.vector_store %arg5[%c1_23, %c0_24, %c0_25], %97 {strides = array<i32>} : memref<2x8x32xf32, #tpu.memory_space<vmem>>, vector<1x8x32xf32>,
    %c0_26 = arith.constant 0 : index
    %c0_27 = arith.constant 0 : index
    %c0_28 = arith.constant 0 : index
    %98 = vector.load %arg6[%c0_26, %c0_27, %c0_28] : memref<2x8x32xf32, #tpu.memory_space<vmem>>, vector<1x8x32xf32>
    %99 = vector.shape_cast %98 : vector<1x8x32xf32> to vector<8x32xf32>
    %100 = vector.shape_cast %68 : vector<8x32xf32> to vector<1x8x32xf32>
    tpu.vector_store %arg6[%c0_26, %c0_27, %c0_28], %100 {strides = array<i32>} : memref<2x8x32xf32, #tpu.memory_space<vmem>>, vector<1x8x32xf32>,
    %c1_29 = arith.constant 1 : index
    %c0_30 = arith.constant 0 : index
    %c0_31 = arith.constant 0 : index
    %101 = vector.load %arg6[%c1_29, %c0_30, %c0_31] : memref<2x8x32xf32, #tpu.memory_space<vmem>>, vector<1x8x32xf32>
    %102 = vector.shape_cast %101 : vector<1x8x32xf32> to vector<8x32xf32>
    %103 = vector.shape_cast %73 : vector<8x32xf32> to vector<1x8x32xf32>
    tpu.vector_store %arg6[%c1_29, %c0_30, %c0_31], %103 {strides = array<i32>} : memref<2x8x32xf32, #tpu.memory_space<vmem>>, vector<1x8x32xf32>,
    return
  }
  func.func @transform_0(%arg0: i32, %arg1: i32) -> (i32, i32) {
    %c0_i32 = arith.constant 0 : i32
    %c0_i32_0 = arith.constant 0 : i32
    return %arg1, %c0_i32 : i32, i32
  }
  func.func @transform_1(%arg0: i32, %arg1: i32) -> (i32, i32, i32) {
    %c0_i32 = arith.constant 0 : i32
    %c0_i32_0 = arith.constant 0 : i32
    return %c0_i32, %arg1, %arg0 : i32, i32, i32
  }
  func.func @transform_2(%arg0: i32, %arg1: i32) -> (i32, i32, i32) {
    %c0_i32 = arith.constant 0 : i32
    %c0_i32_0 = arith.constant 0 : i32
    %c0_i32_1 = arith.constant 0 : i32
    return %arg0, %c0_i32, %c0_i32_0 : i32, i32, i32
  }
  func.func @transform_3(%arg0: i32, %arg1: i32) -> (i32, i32, i32) {
    %c0_i32 = arith.constant 0 : i32
    %c0_i32_0 = arith.constant 0 : i32
    return %c0_i32, %arg1, %arg0 : i32, i32, i32
  }
  func.func @transform_4(%arg0: i32, %arg1: i32) -> (i32, i32, i32) {
    %c0_i32 = arith.constant 0 : i32
    %c0_i32_0 = arith.constant 0 : i32
    return %c0_i32, %arg1, %arg0 : i32, i32, i32
  }
}

</mosaic_0001>

<llo_original>
// kernel: lstm_cell_forward.1
$region0: #{lstm_cell_forward.1}
  #allocation0 [shape = 'u32[]', space=smem, size = 0x4, offset = 0x4, fixed_abs, tag = 'smem constant byte address 0x4 - core index']
  #allocation1 [shape = 'u32[144,128]{1,0:T(1,128)}', space=vmem, size = 0x12000, scoped, tag = 'internal scratch']
  %s0 = inlined_call_operand.vmem [shape: f32[8,81], index: 0, kind: input, shape index: {}]
  %s1 = inlined_call_operand.vmem [shape: f32[2,8,32], index: 1, kind: input, shape index: {}, may-alias: {1,4}]
  %s2 = inlined_call_operand.vmem [shape: f32[1,81,288], index: 2, kind: input, shape index: {}]
  %s3 = inlined_call_operand.vmem [shape: f32[2,8,32], index: 3, kind: output, shape index: {0}]
  %s4 = inlined_call_operand.vmem [shape: f32[2,8,32], index: 4, kind: output, shape index: {1}, may-alias: {1,4}]
  %5 = xla_tuple %s3, %s4
  %s6 = sld [smem:[#allocation0]]
  $region30: #{lstm_cell_forward.1} parent=0
    _
  %s8 = ssub.s32 1, %s6
  %s9 = scalar_select 0, %s8, %s6
  // Predicated region
  $region2: #{lstm_cell_forward.1} parent=0 // pred_check
    _
  $region3: #{lstm_cell_forward.1} parent=0 // pred_check_branch
    %11 = sbr.rel (0) target = $region5
  $region4: #{lstm_cell_forward.1} parent=0 // pred_region
    _
  $region5: #{lstm_cell_forward.1} parent=0 // pred_fallthru
    _
  // Predicated region
  $region6: #{lstm_cell_forward.1} parent=0 // pred_check
    _
  $region7: #{lstm_cell_forward.1} parent=0 // pred_check_branch
    %13 = sbr.rel (0) target = $region9
  $region8: #{lstm_cell_forward.1} parent=0 // pred_region
    _
  $region9: #{lstm_cell_forward.1} parent=0 // pred_fallthru
    _
  // Predicated region
  $region10: #{lstm_cell_forward.1} parent=0 // pred_check
    _
  $region11: #{lstm_cell_forward.1} parent=0 // pred_check_branch
    %15 = sbr.rel (0) target = $region13
  $region12: #{lstm_cell_forward.1} parent=0 // pred_region
    _
  $region13: #{lstm_cell_forward.1} parent=0 // pred_fallthru
    _
  %v16 = vld [vmem:[%s0] sm:$0xff]
  %v17 = vld [vmem:[%s2] sm:$0xff]
  %v18 = vld [vmem:[%s2 + $0x8] sm:$0xff]
  %v19 = vld [vmem:[%s2 + $0x10] sm:$0xff]
  %v20 = vld [vmem:[%s2 + $0x18] sm:$0xff]
  %v21 = vld [vmem:[%s2 + $0x20] sm:$0xff]
  %v22 = vld [vmem:[%s2 + $0x28] sm:$0xff]
  %v23 = vld [vmem:[%s2 + $0x30] sm:$0xff]
  %v24 = vld [vmem:[%s2 + $0x38] sm:$0xff]
  %v25 = vld [vmem:[%s2 + $0x40] sm:$0xff]
  %v26 = vld [vmem:[%s2 + $0x48] sm:$0xff]
  %v27 = vld [vmem:[%s2 + $0x50] sm:$0xff]
  %v28 = vld [vmem:[%s2 + $0x58] sm:$0xff]
  %v29 = vld [vmem:[%s2 + $0x60] sm:$0xff]
  %v30 = vld [vmem:[%s2 + $0x68] sm:$0xff]
  %v31 = vld [vmem:[%s2 + $0x70] sm:$0xff]
  %v32 = vld [vmem:[%s2 + $0x78] sm:$0xff]
  %v33 = vld [vmem:[%s2 + $0x80] sm:$0xff]
  %v34 = vld [vmem:[%s2 + $0x88] sm:$0xff]
  %v35 = vld [vmem:[%s2 + $0x90] sm:$0xff]
  %v36 = vld [vmem:[%s2 + $0x98] sm:$0xff]
  %v37 = vld [vmem:[%s2 + $0xa0] sm:$0xff]
  %v38 = vld [vmem:[%s2 + $0xa8] sm:$0xff]
  %v39 = vld [vmem:[%s2 + $0xb0] sm:$0xff]
  %v40 = vld [vmem:[%s2 + $0xb8] sm:$0xff]
  %v41 = vld [vmem:[%s2 + $0xc0] sm:$0xff]
  %v42 = vld [vmem:[%s2 + $0xc8] sm:$0xff]
  %v43 = vld [vmem:[%s2 + $0xd0] sm:$0xff]
  %v44 = vld [vmem:[%s2 + $0xd8] sm:$0xff]
  %v45 = vld [vmem:[%s2 + $0xe0] sm:$0xff]
  %v46 = vld [vmem:[%s2 + $0xe8] sm:$0xff]
  %v47 = vld [vmem:[%s2 + $0xf0] sm:$0x1]
  %v48 = vld [vmem:[%s2 + $0xf8] sm:$0x1]
  %v49 = vld [vmem:[%s2 + $0x100] sm:$0x1]
  %vm50 = vcmask 662528
  %v52 = vsel %vm50, %v16, 0
  %vm54 = vcmask 1040384
  %v56 = vsel %vm54, %v47, 0
  %v59 = vsel %vm54, %v48, 0
  %v62 = vsel %vm54, %v49, 0
  %64 = vmatprep.subr.mxu0 %v18
  %65 = vmatpush1.msra.mxu0 %v17
  %66 = vmatprep.subr.mxu0 %v21
  %67 = vmatpush1.msra.mxu0 %v20
  %68 = vmatprep.subr.mxu0 %v24
  %69 = vmatpush1.msra.mxu0 %v23
  %70 = vmatprep.subr.mxu0 %v27
  %71 = vmatpush1.msra.mxu0 %v26
  %72 = vmatprep.subr.mxu0 %v30
  %73 = vmatpush1.msra.mxu0 %v29
  %74 = vmatprep.subr.mxu0 %v33
  %75 = vmatpush1.msra.mxu0 %v32
  %76 = vmatprep.subr.mxu0 %v36
  %77 = vmatpush1.msra.mxu0 %v35
  %78 = vmatprep.subr.mxu0 %v39
  %79 = vmatpush1.msra.mxu0 %v38
  %80 = vmatprep.subr.mxu0 %v42
  %81 = vmatpush1.msra.mxu0 %v41
  %82 = vmatprep.subr.mxu0 %v45
  %83 = vmatpush1.msra.mxu0 %v44
  %84 = vmatprep.subr.mxu0 %v59
  %85 = vmatpush1.msra.mxu0 %v56
  %86 = vmatprep.subr.mxu0 0.0
  %87 = vmatpush1.msra.mxu0 0.0
  %88 = vmatprep.subr.mxu0 0.0
  %89 = vmatpush1.msra.mxu0 0.0
  %90 = vmatprep.subr.mxu0 0.0
  %91 = vmatpush1.msra.mxu0 0.0
  %92 = vmatprep.subr.mxu0 0.0
  %93 = vmatpush1.msra.mxu0 0.0
  %94 = vmatprep.subr.mxu0 0.0
  %95 = vmatpush1.msra.mxu0 0.0
  %96 = vmatprep.subr.mxu0 0.0
  %97 = vmatpush1.msra.mxu0 0.0
  %98 = vmatprep.subr.mxu0 0.0
  %99 = vmatpush1.msra.mxu0 0.0
  %100 = vmatprep.subr.mxu0 0.0
  %101 = vmatpush1.msra.mxu0 0.0
  %102 = vmatprep.subr.mxu0 0.0
  %103 = vmatpush1.msra.mxu0 0.0
  %104 = vmatprep.subr.mxu0 0.0
  %105 = vmatpush1.msra.mxu0 0.0
  %106 = vmatprep.subr.mxu0 0.0
  %107 = vmatpush1.msra.mxu0 0.0
  %108 = vmatprep.subr.mxu0 0.0
  %109 = vmatpush1.msra.mxu0 0.0
  %110 = vmatprep.subr.mxu0 0.0
  %111 = vmatpush1.msra.mxu0 0.0
  %112 = vmatprep.subr.mxu0 0.0
  %113 = vmatpush1.msra.mxu0 0.0
  %114 = vmatprep.subr.mxu0 0.0
  %115 = vmatpush1.msra.mxu0 0.0
  %116 = vmatprep.subr.mxu0 0.0
  %117 = vmatpush1.msra.mxu0 0.0
  %118 = vmatprep.subr.mxu0 0.0
  %119 = vmatpush1.msra.mxu0 0.0
  %120 = vmatprep.subr.mxu0 0.0
  %121 = vmatpush1.msra.mxu0 0.0
  %122 = vmatprep.subr.mxu0 0.0
  %123 = vmatpush1.msra.mxu0 0.0
  %124 = vmatprep.subr.mxu0 0.0
  %125 = vmatpush1.msra.mxu0 0.0
  %126 = vmatprep.subr.mxu0 0.0
  %127 = vmatpush1.msra.mxu0 0.0
  %128 = vmatprep.mubr.f32.mxu0 0.0
  %129 = vmatmul.mubr.f32.gmra.mrb[0].mxu0 %v52
  %v130 = vpop.f32.mrb[0].mxu0
  %v131 = vadd.f32 0.0, %v130
  %v132 = vpop.f32.mrb[0].mxu0
  %v133 = vadd.f32 0.0, %v132
  %134 = vdwg.mxu0
  %135 = vmatprep.subr.mxu0 0.0
  %136 = vmatpush1.msra.mxu0 %v19
  %137 = vmatprep.subr.mxu0 0.0
  %138 = vmatpush1.msra.mxu0 %v22
  %139 = vmatprep.subr.mxu0 0.0
  %140 = vmatpush1.msra.mxu0 %v25
  %141 = vmatprep.subr.mxu0 0.0
  %142 = vmatpush1.msra.mxu0 %v28
  %143 = vmatprep.subr.mxu0 0.0
  %144 = vmatpush1.msra.mxu0 %v31
  %145 = vmatprep.subr.mxu0 0.0
  %146 = vmatpush1.msra.mxu0 %v34
  %147 = vmatprep.subr.mxu0 0.0
  %148 = vmatpush1.msra.mxu0 %v37
  %149 = vmatprep.subr.mxu0 0.0
  %150 = vmatpush1.msra.mxu0 %v40
  %151 = vmatprep.subr.mxu0 0.0
  %152 = vmatpush1.msra.mxu0 %v43
  %153 = vmatprep.subr.mxu0 0.0
  %154 = vmatpush1.msra.mxu0 %v46
  %155 = vmatprep.subr.mxu0 0.0
  %156 = vmatpush1.msra.mxu0 %v62
  %157 = vmatprep.subr.mxu0 0.0
  %158 = vmatpush1.msra.mxu0 0.0
  %159 = vmatprep.subr.mxu0 0.0
  %160 = vmatpush1.msra.mxu0 0.0
  %161 = vmatprep.subr.mxu0 0.0
  %162 = vmatpush1.msra.mxu0 0.0
  %163 = vmatprep.subr.mxu0 0.0
  %164 = vmatpush1.msra.mxu0 0.0
  %165 = vmatprep.subr.mxu0 0.0
  %166 = vmatpush1.msra.mxu0 0.0
  %167 = vmatprep.subr.mxu0 0.0
  %168 = vmatpush1.msra.mxu0 0.0
  %169 = vmatprep.subr.mxu0 0.0
  %170 = vmatpush1.msra.mxu0 0.0
  %171 = vmatprep.subr.mxu0 0.0
  %172 = vmatpush1.msra.mxu0 0.0
  %173 = vmatprep.subr.mxu0 0.0
  %174 = vmatpush1.msra.mxu0 0.0
  %175 = vmatprep.subr.mxu0 0.0
  %176 = vmatpush1.msra.mxu0 0.0
  %177 = vmatprep.subr.mxu0 0.0
  %178 = vmatpush1.msra.mxu0 0.0
  %179 = vmatprep.subr.mxu0 0.0
  %180 = vmatpush1.msra.mxu0 0.0
  %181 = vmatprep.subr.mxu0 0.0
  %182 = vmatpush1.msra.mxu0 0.0
  %183 = vmatprep.subr.mxu0 0.0
  %184 = vmatpush1.msra.mxu0 0.0
  %185 = vmatprep.subr.mxu0 0.0
  %186 = vmatpush1.msra.mxu0 0.0
  %187 = vmatprep.subr.mxu0 0.0
  %188 = vmatpush1.msra.mxu0 0.0
  %189 = vmatprep.subr.mxu0 0.0
  %190 = vmatpush1.msra.mxu0 0.0
  %191 = vmatprep.subr.mxu0 0.0
  %192 = vmatpush1.msra.mxu0 0.0
  %193 = vmatprep.subr.mxu0 0.0
  %194 = vmatpush1.msra.mxu0 0.0
  %195 = vmatprep.subr.mxu0 0.0
  %196 = vmatpush1.msra.mxu0 0.0
  %197 = vmatprep.subr.mxu0 0.0
  %198 = vmatpush1.msra.mxu0 0.0
  %199 = vmatprep.mubr.f32.mxu0 0.0
  %200 = vmatmul.mubr.f32.gmra.mrb[0].mxu0 %v52
  %v201 = vpop.f32.mrb[0].mxu0
  %v202 = vadd.f32 0.0, %v201
  %v203 = vpop.f32.mrb[0].mxu0
  %204 = vdwg.mxu0
  %v205 = vxor.u32 %v131, 2147483648
  %v206 = vmul.f32 %v205, 1.442695
  %v207 = vpow.pop %v206
  %v208 = vadd.f32 %v207, 1.0
  %v209 = vrcp.pop %v208
  %v210 = vmul.f32 1.0, %v209
  %v211 = vmul.f32 %v131, %v131
  %v212 = vmul.f32 %v133, %v133
  %214 = vrot.lane.b32.xlu0 %v212, 96
  %v215 = vpop.permute.xlu0 %214
  %v217 = vadd.f32 %v211, %v215
  %vm218 = vcmp.gt.f32.partialorder %v217, 1.0
  %v219 = vrsqrt.pop %v217
  %v220 = vsel %vm218, %v219, 1.0
  %v221 = vmul.f32 %v131, %v220
  %223 = vrot.lane.b32.xlu0 %v220, 32
  %v224 = vpop.permute.xlu0 %223
  %v226 = vmul.f32 %v133, %v224
  %v227 = vadd.f32 %v212, %v215
  %vm228 = vcmp.gt.f32.partialorder %v227, 1.0
  %v229 = vrsqrt.pop %v227
  %v230 = vsel %vm228, %v229, 1.0
  %v231 = vmul.f32 %v133, %v230
  %233 = vrot.lane.b32.xlu0 %v230, 32
  %v234 = vpop.permute.xlu0 %233
  %v236 = vmul.f32 %v133, %v234
  %v237 = vmul.f32 %v202, %v202
  %239 = vrot.lane.b32.xlu0 %v237, 96
  %v240 = vpop.permute.xlu0 %239
  %v242 = vadd.f32 %v212, %v240
  %vm243 = vcmp.gt.f32.partialorder %v242, 1.0
  %v244 = vrsqrt.pop %v242
  %v245 = vsel %vm243, %v244, 1.0
  %v246 = vmul.f32 %v133, %v245
  %248 = vrot.lane.b32.xlu0 %v245, 32
  %v249 = vpop.permute.xlu0 %248
  %v251 = vmul.f32 %v202, %v249
  %v252 = vld [vmem:[%s1] sm:$0xff]
  %s253 = scalar_lea.vmem %s1, 8
  %v254 = vld [vmem:[%s253] sm:$0xff]
  %256 = vrot.lane.b32.xlu0 %v246, 64
  %v257 = vpop.permute.xlu0 %256
  %v259 = vmul.f32 %v210, %v257
  %261 = vrot.lane.b32.xlu0 %v251, 32
  %v262 = vpop.permute.xlu0 %261
  %v264 = vmul.f32 %v210, %v262
  %v265 = vmul.f32 %v210, %v252
  %267 = vrot.lane.b32.xlu0 %v259, 64
  %v268 = vpop.permute.xlu0 %267
  %v270 = vmul.f32 %v221, %v268
  %272 = vrot.lane.b32.xlu0 %v264, 96
  %v273 = vpop.permute.xlu0 %272
  %v275 = vmul.f32 %v226, %v273
  %277 = vrot.lane.b32.xlu0 %v275, 96
  %v278 = vpop.permute.xlu0 %277
  %v280 = vsub.f32 %v270, %v278
  %282 = vrot.lane.b32.xlu0 %v280, 32
  %v283 = vpop.permute.xlu0 %282
  %v285 = vadd.f32 %v265, %v283
  %v286 = vmul.f32 %v210, %v254
  %287 = vrot.lane.b32.xlu0 %v264, 64
  %v288 = vpop.permute.xlu0 %287
  %v290 = vmul.f32 %v221, %v288
  %291 = vrot.lane.b32.xlu0 %v259, 96
  %v292 = vpop.permute.xlu0 %291
  %v294 = vmul.f32 %v226, %v292
  %296 = vrot.lane.b32.xlu0 %v294, 96
  %v297 = vpop.permute.xlu0 %296
  %v299 = vadd.f32 %v290, %v297
  %301 = vrot.lane.b32.xlu0 %v299, 32
  %v302 = vpop.permute.xlu0 %301
  %v304 = vadd.f32 %v286, %v302
  %306 = vrot.lane.b32.xlu0 %v285, 32
  %v307 = vpop.permute.xlu0 %306
  %v309 = vmul.f32 %v231, %v307
  %311 = vrot.lane.b32.xlu0 %v304, 64
  %v312 = vpop.permute.xlu0 %311
  %v314 = vmul.f32 %v236, %v312
  %316 = vrot.lane.b32.xlu0 %v314, 96
  %v317 = vpop.permute.xlu0 %316
  %v319 = vsub.f32 %v309, %v317
  %320 = vrot.lane.b32.xlu0 %v304, 32
  %v321 = vpop.permute.xlu0 %320
  %v323 = vmul.f32 %v231, %v321
  %324 = vrot.lane.b32.xlu0 %v285, 64
  %v325 = vpop.permute.xlu0 %324
  %v327 = vmul.f32 %v236, %v325
  %329 = vrot.lane.b32.xlu0 %v327, 96
  %v330 = vpop.permute.xlu0 %329
  %v332 = vadd.f32 %v323, %v330
  %v333 = vmul.f32 %v319, %v319
  %v334 = vmul.f32 %v332, %v332
  %v335 = vadd.f32 %v333, %v334
  %vm336 = vcmp.gt.f32.partialorder %v335, 1.0
  %v337 = vrsqrt.pop %v335
  %v338 = vsel %vm336, %v337, 1.0
  %v339 = vmul.f32 %v319, %v338
  %v340 = vmul.f32 %v332, %v338
  %342 = vrot.lane.b32.xlu0 %v339, 32
  %v343 = vpop.permute.xlu0 %342
  %v345 = vmul.f32 %v210, %v343
  %347 = vrot.lane.b32.xlu0 %v345, 64
  %v348 = vpop.permute.xlu0 %347
  %vm350 = vcmask 261120
  %351 = vst.msk [vmem:[%s3] sm:$0xff] %vm350, %v348
  %353 = vrot.lane.b32.xlu0 %v340, 32
  %v354 = vpop.permute.xlu0 %353
  %v356 = vmul.f32 %v210, %v354
  %358 = vrot.lane.b32.xlu0 %v356, 64
  %v359 = vpop.permute.xlu0 %358
  %s361 = scalar_lea.vmem %s3, 8
  %362 = vst.msk [vmem:[%s361] sm:$0xff] %vm350, %v359
  %363 = vst.msk [vmem:[%s4] sm:$0xff] %vm350, %v285
  %s364 = scalar_lea.vmem %s4, 8
  %365 = vst.msk [vmem:[%s364] sm:$0xff] %vm350, %v304
  // Predicated region
  $region14: #{lstm_cell_forward.1} parent=0 // pred_check
    _
  $region15: #{lstm_cell_forward.1} parent=0 // pred_check_branch
    %367 = sbr.rel (0) target = $region17
  $region16: #{lstm_cell_forward.1} parent=0 // pred_region
    _
  $region17: #{lstm_cell_forward.1} parent=0 // pred_fallthru
    _
  // Predicated region
  $region18: #{lstm_cell_forward.1} parent=0 // pred_check
    _
  $region19: #{lstm_cell_forward.1} parent=0 // pred_check_branch
    %369 = sbr.rel (0) target = $region21
  $region20: #{lstm_cell_forward.1} parent=0 // pred_region
    _
  $region21: #{lstm_cell_forward.1} parent=0 // pred_fallthru
    _
  // Predicated region
  $region22: #{lstm_cell_forward.1} parent=0 // pred_check
    _
  $region23: #{lstm_cell_forward.1} parent=0 // pred_check_branch
    %371 = sbr.rel (0) target = $region25
  $region24: #{lstm_cell_forward.1} parent=0 // pred_region
    _
  $region25: #{lstm_cell_forward.1} parent=0 // pred_fallthru
    _
  // Predicated region
  $region26: #{lstm_cell_forward.1} parent=0 // pred_check
    _
  $region27: #{lstm_cell_forward.1} parent=0 // pred_check_branch
    %373 = sbr.rel (0) target = $region29
  $region28: #{lstm_cell_forward.1} parent=0 // pred_region
    _
  $region29: #{lstm_cell_forward.1} parent=0 // pred_fallthru
    _

</llo_original>
